<compile_context>
chip_gen: v6e
topology: v6e:2x2x1
jax: 0.10.0
libtpu: 0.0.40
codegen_flags: <defaults>
</compile_context>

<pallas_src>
import math

import jax
import jax.numpy as jnp
from jax.experimental import pallas as pl
from jax.experimental.pallas import tpu as pltpu


# ----------------------------- Pallas kernel --------------------------------

def _round_up(x, m):
    return ((x + m - 1) // m) * m


def _matmul_bias_kernel(x_ref, w_ref, b_ref, o_ref, acc_ref):
    # x_ref: (bm, bk), w_ref: (bk, bn), b_ref: (1, bn) f32,
    # o_ref: (bm, bn), acc_ref: (bm, bn) f32 scratch persistent across K.
    k = pl.program_id(2)

    @pl.when(k == 0)
    def _():
        acc_ref[...] = jnp.zeros_like(acc_ref)

    acc_ref[...] += jnp.dot(x_ref[...], w_ref[...],
                            preferred_element_type=jnp.float32)

    @pl.when(k == pl.num_programs(2) - 1)
    def _():
        o_ref[...] = (acc_ref[...] + b_ref[...]).astype(o_ref.dtype)


def fused_proj(x, w_IO, bias_O, *, bm=None, bn=None, bk=None,
               compute_dtype=None, out_dtype=None):
    """Compute x @ w_IO + bias_O with a tiled Pallas TPU kernel.

    x:      [B, I]
    w_IO:   [I, O]
    bias_O: [O]
    returns [B, O] in out_dtype (default: x.dtype)
    """
    B, I = x.shape
    I2, O = w_IO.shape
    assert I == I2
    out_dtype = out_dtype or x.dtype

    # ---- tile selection: MXU-sized, VMEM-bounded ----
    # f32 worst case: 2*(bm*bk) + 2*(bk*bn) + 2*(bm*bn) + bm*bn (acc) + bias
    # with 512-tiles ~= 7.5 MiB, safely under every chip's default scoped VMEM.
    if bm is None:
        bm = min(512, _round_up(B, 8))
    bm = _round_up(bm, 8)
    if bn is None:
        bn = min(512, _round_up(O, 128))
    bn = _round_up(bn, 128)
    if bk is None:
        bk = 512 if I > 1024 else _round_up(I, 128)
    bk = _round_up(bk, 128)

    B_pad = _round_up(B, bm)
    O_pad = _round_up(O, bn)
    I_pad = _round_up(I, bk)

    if compute_dtype is not None:
        x = x.astype(compute_dtype)
        w_IO = w_IO.astype(compute_dtype)

    # Zero-padding to tile multiples does not change the matmul result;
    # it also makes the output lane dimension dense (multiple of 128).
    if (B_pad, I_pad) != (B, I):
        x = jnp.pad(x, ((0, B_pad - B), (0, I_pad - I)))
    if (I_pad, O_pad) != (I, O):
        w_IO = jnp.pad(w_IO, ((0, I_pad - I), (0, O_pad - O)))
    bias_2d = jnp.pad(bias_O, (0, O_pad - O)).reshape(1, O_pad).astype(jnp.float32)

    grid = (B_pad // bm, O_pad // bn, I_pad // bk)

    out_p = pl.pallas_call(
        _matmul_bias_kernel,
        out_shape=jax.ShapeDtypeStruct((B_pad, O_pad), out_dtype),
        grid_spec=pltpu.PrefetchScalarGridSpec(
            num_scalar_prefetch=0,
            grid=grid,
            in_specs=[
                pl.BlockSpec((bm, bk), lambda i, j, k: (i, k)),   # x tile
                pl.BlockSpec((bk, bn), lambda i, j, k: (k, j)),   # weight tile
                pl.BlockSpec((1, bn), lambda i, j, k: (0, j)),    # bias tile
            ],
            out_specs=pl.BlockSpec((bm, bn), lambda i, j, k: (i, j)),
            scratch_shapes=[pltpu.VMEM((bm, bn), jnp.float32)],
        ),
        compiler_params=pltpu.CompilerParams(
            dimension_semantics=("parallel", "parallel", "arbitrary")),
    )(x, w_IO, bias_2d)

    return out_p[:B, :O]


# --------------------------- Parameter construction --------------------------

def _kaiming_uniform(key, shape, dtype=jnp.float32):
    # PyTorch kaiming_uniform_(a=sqrt(5)) on a (out, in) matrix:
    # bound = sqrt(1 / fan_in), fan_in = shape[1]
    fan_in = shape[1]
    bound = 1.0 / math.sqrt(fan_in)
    return jax.random.uniform(key, shape, dtype, minval=-bound, maxval=bound)


def init_attention_proj_mkm(key, in_features, out_dims, factors, bias=True,
                            dtype=jnp.float32):
    """Returns params: list (one per out_dim) of dict with 'expansions' and 'bias'."""
    params = []
    for out_dim in out_dims:
        expansions = []
        for (f1, f2) in factors:
            I1 = in_features // f1
            I2 = f1
            O1 = out_dim // f2
            O2 = f2
            key, k1, k2 = jax.random.split(key, 3)
            w_O1I1 = _kaiming_uniform(k1, (O1, I1), dtype)
            w_O2I2 = _kaiming_uniform(k2, (O2, I2), dtype)
            expansions.append((w_O1I1, w_O2I2))
        if bias:
            key, kb = jax.random.split(key)
            bnd = 1.0 / math.sqrt(in_features)
            bias_O = jax.random.uniform(kb, (out_dim,), dtype, minval=-bnd, maxval=bnd)
        else:
            bias_O = jnp.zeros((out_dim,), dtype)
        params.append({"expansions": expansions, "bias": bias_O})
    return params


def build_fused_weight_and_bias(params, expansions_to_use=None):
    """Glue: sum-of-Kroneckers per head, transpose, concat along output dim.

    expansions_to_use mirrors the 'multi_partial' mode (None == use all).
    """
    w_blocks = []
    b_blocks = []
    for head in params:
        exps = head["expansions"]
        idxs = range(len(exps)) if expansions_to_use is None else expansions_to_use
        W_sum_OI = None
        for i in idxs:
            w_O1I1, w_O2I2 = exps[i]
            kron_OI = jnp.kron(w_O2I2, w_O1I1)  # (O2*O1, I2*I1) = (O, I)
            W_sum_OI = kron_OI if W_sum_OI is None else W_sum_OI + kron_OI
        w_blocks.append(W_sum_OI.T)             # (I, O_head)
        b_blocks.append(head["bias"])
    return jnp.concatenate(w_blocks, axis=1), jnp.concatenate(b_blocks, axis=0)


def make_attention_proj_mkm_apply(params, expansions_to_use=None, **proj_kwargs):
    """Build the fused [I, O] weight/bias ONCE (hoisted out of the hot path)
    and return a jitted apply(x) that only runs the Pallas matmul+bias."""
    w_IO, bias_O = build_fused_weight_and_bias(params, expansions_to_use)

    @jax.jit
    def apply(x):
        return fused_proj(x, w_IO, bias_O, **proj_kwargs)

    return apply


def attention_proj_mkm_forward(x, params, expansions_to_use=None):
    # Convenience one-shot path (re-builds the fused weight each call).
    w_IO, bias_O = build_fused_weight_and_bias(params, expansions_to_use)
    return fused_proj(x, w_IO, bias_O)


# ---------------------------------- Main -------------------------------------

if __name__ == "__main__":
    key = jax.random.PRNGKey(0)

    B = 12                        # deliberately not a multiple of 8: exercises padding
    in_features = 32
    out_dims = [16, 16, 32]       # e.g. q/k/v projection widths -> O_total = 64
    factors = [[4, 4], [8, 2]]    # two Kronecker expansions per head

    key, kx, kp = jax.random.split(key, 3)
    x = jax.random.normal(kx, (B, in_features), jnp.float32)
    params = init_attention_proj_mkm(kp, in_features, out_dims, factors, bias=True)

    # Hot path: weight fusion hoisted, kernel jitted.
    apply_fn = make_attention_proj_mkm_apply(params)
    out = jax.block_until_ready(apply_fn(x))

    # Pure-JAX reference for correctness.
    w_IO, bias_O = build_fused_weight_and_bias(params)
    ref = x @ w_IO + bias_O
    assert out.shape == (B, sum(out_dims))
    assert jnp.allclose(out, ref, atol=1e-5, rtol=1e-5)

    # Optional bf16 compute path (recommended for v6e/v7x): f32 accumulation
    # inside the kernel, so only input precision changes.
    out_bf16 = jax.block_until_ready(
        fused_proj(x, w_IO, bias_O, compute_dtype=jnp.bfloat16,
                   out_dtype=jnp.float32))
    assert jnp.allclose(out_bf16, ref, atol=5e-2, rtol=5e-2)

    print("KERNEL_OK")
</pallas_src>

<mosaic_0001>
module attributes {stable_mosaic.version = 11 : i64} {
  func.func @_matmul_bias_kernel(%arg0: i32, %arg1: i32, %arg2: i32, %arg3: memref<16x128xf32, #tpu.memory_space<vmem>>, %arg4: memref<128x128xf32, #tpu.memory_space<vmem>>, %arg5: memref<1x128xf32, #tpu.memory_space<vmem>>, %arg6: memref<16x128xf32, #tpu.memory_space<vmem>>, %arg7: memref<16x128xf32, #tpu.memory_space<vmem>>) attributes {dimension_semantics = [#tpu.dimension_semantics<parallel>, #tpu.dimension_semantics<parallel>, #tpu.dimension_semantics<arbitrary>], iteration_bounds = array<i64: 1, 1, 1>, scalar_prefetch = 0 : i64, scratch_operands = 1 : i64, tpu.core_type = #tpu.core_type<tc>, window_params = [{transform_indices = @transform_0, window_bounds = array<i64: 16, 128>}, {transform_indices = @transform_1, window_bounds = array<i64: 128, 128>}, {transform_indices = @transform_2, window_bounds = array<i64: 1, 128>}, {transform_indices = @transform_3, window_bounds = array<i64: 16, 128>}]} {
    %c0_i32 = arith.constant 0 : i32
    %0 = arith.cmpi eq, %arg2, %c0_i32 : i32
    %1 = arith.extui %0 : i1 to i32
    %c0_i32_0 = arith.constant 0 : i32
    %2 = arith.cmpi ne, %1, %c0_i32_0 : i32
    scf.if %2 {
      %cst_10 = arith.constant 0.000000e+00 : f32
      %12 = vector.broadcast %cst_10 : f32 to vector<16x128xf32>
      %c0_11 = arith.constant 0 : index
      %c0_12 = arith.constant 0 : index
      %13 = vector.load %arg7[%c0_11, %c0_12] : memref<16x128xf32, #tpu.memory_space<vmem>>, vector<16x128xf32>
      tpu.vector_store %arg7[%c0_11, %c0_12], %12 {strides = array<i32>} : memref<16x128xf32, #tpu.memory_space<vmem>>, vector<16x128xf32>,
    } else {
    }
    %c0 = arith.constant 0 : index
    %c0_1 = arith.constant 0 : index
    %3 = vector.load %arg7[%c0, %c0_1] : memref<16x128xf32, #tpu.memory_space<vmem>>, vector<16x128xf32>
    %c0_2 = arith.constant 0 : index
    %c0_3 = arith.constant 0 : index
    %4 = vector.load %arg3[%c0_2, %c0_3] : memref<16x128xf32, #tpu.memory_space<vmem>>, vector<16x128xf32>
    %c0_4 = arith.constant 0 : index
    %c0_5 = arith.constant 0 : index
    %5 = vector.load %arg4[%c0_4, %c0_5] : memref<128x128xf32, #tpu.memory_space<vmem>>, vector<128x128xf32>
    %cst = arith.constant dense<0.000000e+00> : vector<16x128xf32>
    %6 = tpu.matmul %4, %5, %cst {dimension_numbers = #tpu.dot_dimension_numbers<[1], [0], [0], [1], [0, 0, 1, 1], [], []>} : vector<16x128xf32>, vector<128x128xf32>, vector<16x128xf32> -> vector<16x128xf32>
    %7 = arith.addf %3, %6 : vector<16x128xf32>
    %c0_6 = arith.constant 0 : index
    %c0_7 = arith.constant 0 : index
    %8 = vector.load %arg7[%c0_6, %c0_7] : memref<16x128xf32, #tpu.memory_space<vmem>>, vector<16x128xf32>
    tpu.vector_store %arg7[%c0_6, %c0_7], %7 {strides = array<i32>} : memref<16x128xf32, #tpu.memory_space<vmem>>, vector<16x128xf32>,
    %c0_i32_8 = arith.constant 0 : i32
    %9 = arith.cmpi eq, %arg2, %c0_i32_8 : i32
    %10 = arith.extui %9 : i1 to i32
    %c0_i32_9 = arith.constant 0 : i32
    %11 = arith.cmpi ne, %10, %c0_i32_9 : i32
    scf.if %11 {
      %c0_10 = arith.constant 0 : index
      %c0_11 = arith.constant 0 : index
      %12 = vector.load %arg7[%c0_10, %c0_11] : memref<16x128xf32, #tpu.memory_space<vmem>>, vector<16x128xf32>
      %c0_12 = arith.constant 0 : index
      %c0_13 = arith.constant 0 : index
      %13 = vector.load %arg5[%c0_12, %c0_13] : memref<1x128xf32, #tpu.memory_space<vmem>>, vector<1x128xf32>
      %14 = vector.broadcast %13 : vector<1x128xf32> to vector<16x128xf32>
      %15 = arith.addf %12, %14 : vector<16x128xf32>
      %c0_14 = arith.constant 0 : index
      %c0_15 = arith.constant 0 : index
      %16 = vector.load %arg6[%c0_14, %c0_15] : memref<16x128xf32, #tpu.memory_space<vmem>>, vector<16x128xf32>
      tpu.vector_store %arg6[%c0_14, %c0_15], %15 {strides = array<i32>} : memref<16x128xf32, #tpu.memory_space<vmem>>, vector<16x128xf32>,
    } else {
    }
    return
  }
  func.func @transform_0(%arg0: i32, %arg1: i32, %arg2: i32) -> (i32, i32) {
    %c0_i32 = arith.constant 0 : i32
    return %arg0, %arg2 : i32, i32
  }
  func.func @transform_1(%arg0: i32, %arg1: i32, %arg2: i32) -> (i32, i32) {
    %c0_i32 = arith.constant 0 : i32
    return %arg2, %arg1 : i32, i32
  }
  func.func @transform_2(%arg0: i32, %arg1: i32, %arg2: i32) -> (i32, i32) {
    %c0_i32 = arith.constant 0 : i32
    %c0_i32_0 = arith.constant 0 : i32
    return %c0_i32, %arg1 : i32, i32
  }
  func.func @transform_3(%arg0: i32, %arg1: i32, %arg2: i32) -> (i32, i32) {
    %c0_i32 = arith.constant 0 : i32
    return %arg0, %arg1 : i32, i32
  }
}

</mosaic_0001>

<llo_original>
// kernel: apply.1
$region0: #{apply.1}
  #allocation0 [shape = 'u32[]', space=smem, size = 0x4, offset = 0x4, fixed_abs, tag = 'smem constant byte address 0x4 - core index']
  #allocation1 [shape = 'u32[144,128]{1,0:T(1,128)}', space=vmem, size = 0x12000, scoped, tag = 'internal scratch']
  #allocation2 [shape = 'f32[16,128]{1,0:T(8,128)}', space=vmem, size = 0x2000, scoped, tag = 'scratch operand']
  %s0 = inlined_call_operand.vmem [shape: f32[16,128], index: 0, kind: input, shape index: {}]
  %s1 = inlined_call_operand.hbm [shape: f32[128,128], index: 1, kind: input, shape index: {}]
  %s2 = inlined_call_operand.vmem [shape: f32[1,128], index: 2, kind: input, shape index: {}]
  %s3 = inlined_call_operand.hbm [shape: f32[16,128], index: 3, kind: output, shape index: {}]
  %s4 = sld [smem:[#allocation0]]
  $region34: #{apply.1} parent=0
    _
  %s6 = ssub.s32 1, %s4
  %s7 = scalar_select 0, %s6, %s4
  $region1: #{apply.1} parent=0
    #allocation3 [shape = 'u8[65536]{0}', space=vmem, size = 0x10000, scoped, tag = 'input window, operand 1, single buffered']
    #allocation4 [shape = 's32[1]{0}', space=sflag, size = 0x4, scoped, tag = 'scoped memory for apply.1']
    #allocation5 [shape = 's32[1]{0}', space=sflag, size = 0x4, scoped, tag = 'scoped memory for apply.1']
    #allocation6 [shape = 'u8[8192]{0}', space=vmem, size = 0x2000, scoped, tag = 'output window, operand 0, single buffered']
    %8 = vsyncpa [#allocation4], 0
    %9 = vsyncpa [#allocation5], 0
    // Predicated region
    $region2: #{apply.1} parent=1 // pred_check
      _
    $region3: #{apply.1} parent=1 // pred_check_branch
      %11 = sbr.rel (0) target = $region5
    $region4: #{apply.1} parent=1 // pred_region
      _
    $region5: #{apply.1} parent=1 // pred_fallthru
      _
    // Predicated region
    $region6: #{apply.1} parent=1 // pred_check
      _
    $region7: #{apply.1} parent=1 // pred_check_branch
      %13 = sbr.rel (0) target = $region9
    $region8: #{apply.1} parent=1 // pred_region
      %s15 = ssub.s32 2048, 2048
      %16 = vsyncadd [#allocation4], %s15
      %s17 = sshll.u32 [#allocation3], 4
      %s18 = int_to_ptr.vmem [resolvable:$true] %s17
      %23 = dma.hbm_to_vmem [thread:$0]  %s1, 2048, %s18, [#allocation4], 128, 128, 8
    $region9: #{apply.1} parent=1 // pred_fallthru
      _
    // Predicated region
    $region10: #{apply.1} parent=1 // pred_check
      _
    $region11: #{apply.1} parent=1 // pred_check_branch
      %25 = sbr.rel (0) target = $region13
    $region12: #{apply.1} parent=1 // pred_region
      _
    $region13: #{apply.1} parent=1 // pred_fallthru
      _
    // Predicated region
    $region14: #{apply.1} parent=1 // pred_check
      _
    $region15: #{apply.1} parent=1 // pred_check_branch
      %27 = sbr.rel (0) target = $region17
    $region16: #{apply.1} parent=1 // pred_region
      %28 = dma.done [#allocation4], 2048
    $region17: #{apply.1} parent=1 // pred_fallthru
      _
    %p29 = scmp.eq.s32.totalorder 0, 0
    // Predicated region
    $region18: #{apply.1} parent=1 // pred_check
      %p30 = pneg %p29
    $region19: #{apply.1} parent=1 // pred_check_branch
      %32 = sbr.rel (%p30) target = $region21
    $region20: #{apply.1} parent=1 // pred_region
      %33 = vst [vmem:[#allocation2] sm:$0xff] 0.0
      %34 = vst [vmem:[#allocation2 + $0x8] sm:$0xff] 0.0
    $region21: #{apply.1} parent=1 // pred_fallthru
      _
    %v35 = vld [vmem:[#allocation2] sm:$0xff]
    %v36 = vld [vmem:[#allocation2 + $0x8] sm:$0xff]
    %v37 = vld [vmem:[%s0] sm:$0xff]
    %v38 = vld [vmem:[%s0 + $0x8] sm:$0xff]
    %v39 = vld [vmem:[#allocation3] sm:$0xff]
    %v40 = vld [vmem:[#allocation3 + $0x8] sm:$0xff]
    %v41 = vld [vmem:[#allocation3 + $0x10] sm:$0xff]
    %v42 = vld [vmem:[#allocation3 + $0x18] sm:$0xff]
    %v43 = vld [vmem:[#allocation3 + $0x20] sm:$0xff]
    %v44 = vld [vmem:[#allocation3 + $0x28] sm:$0xff]
    %v45 = vld [vmem:[#allocation3 + $0x30] sm:$0xff]
    %v46 = vld [vmem:[#allocation3 + $0x38] sm:$0xff]
    %v47 = vld [vmem:[#allocation3 + $0x40] sm:$0xff]
    %v48 = vld [vmem:[#allocation3 + $0x48] sm:$0xff]
    %v49 = vld [vmem:[#allocation3 + $0x50] sm:$0xff]
    %v50 = vld [vmem:[#allocation3 + $0x58] sm:$0xff]
    %v51 = vld [vmem:[#allocation3 + $0x60] sm:$0xff]
    %v52 = vld [vmem:[#allocation3 + $0x68] sm:$0xff]
    %v53 = vld [vmem:[#allocation3 + $0x70] sm:$0xff]
    %v54 = vld [vmem:[#allocation3 + $0x78] sm:$0xff]
    %55 = vmatprep.subr.mxu0 0.0
    %56 = vmatpush1.msra.mxu0 %v54
    %57 = vmatprep.subr.mxu0 0.0
    %58 = vmatpush1.msra.mxu0 %v53
    %59 = vmatprep.subr.mxu0 0.0
    %60 = vmatpush1.msra.mxu0 %v52
    %61 = vmatprep.subr.mxu0 0.0
    %62 = vmatpush1.msra.mxu0 %v51
    %63 = vmatprep.subr.mxu0 0.0
    %64 = vmatpush1.msra.mxu0 %v50
    %65 = vmatprep.subr.mxu0 0.0
    %66 = vmatpush1.msra.mxu0 %v49
    %67 = vmatprep.subr.mxu0 0.0
    %68 = vmatpush1.msra.mxu0 %v48
    %69 = vmatprep.subr.mxu0 0.0
    %70 = vmatpush1.msra.mxu0 %v47
    %71 = vmatprep.subr.mxu0 0.0
    %72 = vmatpush1.msra.mxu0 %v46
    %73 = vmatprep.subr.mxu0 0.0
    %74 = vmatpush1.msra.mxu0 %v45
    %75 = vmatprep.subr.mxu0 0.0
    %76 = vmatpush1.msra.mxu0 %v44
    %77 = vmatprep.subr.mxu0 0.0
    %78 = vmatpush1.msra.mxu0 %v43
    %79 = vmatprep.subr.mxu0 0.0
    %80 = vmatpush1.msra.mxu0 %v42
    %81 = vmatprep.subr.mxu0 0.0
    %82 = vmatpush1.msra.mxu0 %v41
    %83 = vmatprep.subr.mxu0 0.0
    %84 = vmatpush1.msra.mxu0 %v40
    %85 = vmatprep.subr.mxu0 0.0
    %86 = vmatpush1.msra.mxu0 %v39
    %87 = vmatprep.subr.mxu0 0.0
    %88 = vmatpush2.msra.mxu0 0.0
    %89 = vmatprep.subr.mxu0 0.0
    %90 = vmatpush2.msra.mxu0 0.0
    %91 = vmatprep.subr.mxu0 0.0
    %92 = vmatpush2.msra.mxu0 0.0
    %93 = vmatprep.subr.mxu0 0.0
    %94 = vmatpush2.msra.mxu0 0.0
    %95 = vmatprep.subr.mxu0 0.0
    %96 = vmatpush2.msra.mxu0 0.0
    %97 = vmatprep.subr.mxu0 0.0
    %98 = vmatpush2.msra.mxu0 0.0
    %99 = vmatprep.subr.mxu0 0.0
    %100 = vmatpush2.msra.mxu0 0.0
    %101 = vmatprep.subr.mxu0 0.0
    %102 = vmatpush2.msra.mxu0 0.0
    %103 = vmatprep.subr.mxu0 0.0
    %104 = vmatpush2.msra.mxu0 0.0
    %105 = vmatprep.subr.mxu0 0.0
    %106 = vmatpush2.msra.mxu0 0.0
    %107 = vmatprep.subr.mxu0 0.0
    %108 = vmatpush2.msra.mxu0 0.0
    %109 = vmatprep.subr.mxu0 0.0
    %110 = vmatpush2.msra.mxu0 0.0
    %111 = vmatprep.subr.mxu0 0.0
    %112 = vmatpush2.msra.mxu0 0.0
    %113 = vmatprep.subr.mxu0 0.0
    %114 = vmatpush2.msra.mxu0 0.0
    %115 = vmatprep.subr.mxu0 0.0
    %116 = vmatpush2.msra.mxu0 0.0
    %117 = vmatprep.subr.mxu0 0.0
    %118 = vmatpush2.msra.mxu0 0.0
    %119 = vmatprep.mubr.f32.mxu0 0.0
    %120 = vmatmul.mubr.f32.gmra.mxu0 %v37
    %v121 = vpop.f32.mrf.mxu0
    %v122 = vadd.f32 0.0, %v121
    %v123 = vpop.f32.mrf.mxu0
    %124 = vmatprep.mubr.f32.mxu0 0.0
    %125 = vmatmul.mubr.f32.gmra.mxu0 %v38
    %v126 = vpop.f32.mrf.mxu0
    %v127 = vadd.f32 0.0, %v126
    %v128 = vpop.f32.mrf.mxu0
    %129 = vdwg.mxu0
    %v130 = vadd.f32 %v35, %v122
    %v131 = vadd.f32 %v36, %v127
    %132 = vst [vmem:[#allocation2] sm:$0xff] %v130
    %133 = vst [vmem:[#allocation2 + $0x8] sm:$0xff] %v131
    // Predicated region
    $region22: #{apply.1} parent=1 // pred_check
      %p134 = pneg %p29
    $region23: #{apply.1} parent=1 // pred_check_branch
      %136 = sbr.rel (%p134) target = $region25
    $region24: #{apply.1} parent=1 // pred_region
      %v137 = vld [vmem:[#allocation2] sm:$0xff]
      %v138 = vld [vmem:[#allocation2 + $0x8] sm:$0xff]
      %v139 = vld [vmem:[%s2] sm:$0x1]
      %v141 = vlaneseq
      %v142 = vshrl.u32 %v141, 7
      %v143 = vsub.s32 0, %v142
      %v144 = vrot.slane %v139, %v143
      %v146 = vadd.f32 %v137, %v144
      %v147 = vadd.f32 %v138, %v144
      %148 = vst [vmem:[#allocation6] sm:$0xff] %v146
      %149 = vst [vmem:[#allocation6 + $0x8] sm:$0xff] %v147
    $region25: #{apply.1} parent=1 // pred_fallthru
      _
    // Predicated region
    $region26: #{apply.1} parent=1 // pred_check
      _
    $region27: #{apply.1} parent=1 // pred_check_branch
      %151 = sbr.rel (0) target = $region29
    $region28: #{apply.1} parent=1 // pred_region
      %s153 = ssub.s32 256, 256
      %154 = vsyncadd [#allocation5], %s153
      %s155 = sshll.u32 [#allocation6], 4
      %s156 = int_to_ptr.vmem [resolvable:$true] %s155
      %161 = dma.vmem_to_hbm [thread:$0]  %s156, 256, %s3, [#allocation5], 128, 128, 8
    $region29: #{apply.1} parent=1 // pred_fallthru
      _
    // Predicated region
    $region30: #{apply.1} parent=1 // pred_check
      _
    $region31: #{apply.1} parent=1 // pred_check_branch
      %163 = sbr.rel (0) target = $region33
    $region32: #{apply.1} parent=1 // pred_region
      %164 = dma.done [#allocation5], 256
    $region33: #{apply.1} parent=1 // pred_fallthru
      _
    %165 = vsyncpa [#allocation4], 1
    %166 = vsyncpa [#allocation5], 1

</llo_original>
